<compile_context>
chip_gen: v5e
topology: v5e:2x2
jax: 0.10.0
libtpu: 0.0.40
codegen_flags: <defaults>
</compile_context>

<pallas_src>
import numpy as np
import jax
import jax.numpy as jnp
from jax.experimental import pallas as pl
from jax.experimental.pallas import tpu as pltpu

NUM_JOINTS = 17                      # H3.6M-style 17-joint skeleton
JC = NUM_JOINTS * 3                  # 51 flattened (joint, coord) rows

# BONE_PAIRS is a module-level constant in the original code base; it is not
# shipped with the snippet, so we define a deterministic, anatomically sensible
# set of symmetric-limb pairs: ((joint1a, joint1b), (joint2a, joint2b)).
BONE_PAIRS = (
    ((1, 2), (4, 5)),      # right / left upper leg
    ((2, 3), (5, 6)),      # right / left lower leg
    ((11, 12), (14, 15)),  # left / right upper arm
    ((12, 13), (15, 16)),  # left / right lower arm
    ((0, 1), (0, 4)),      # pelvis -> right hip / pelvis -> left hip
    ((8, 11), (8, 14)),    # thorax -> left shoulder / thorax -> right shoulder
)

P = len(BONE_PAIRS)
PG = max(8, ((P + 7) // 8) * 8)      # pair rows per group, padded to 8 sublanes
N_GROUPS = 7                          # 3 coords x 2 bones + 1 finiteness-check group
R_OUT = N_GROUPS * PG                 # 56 selection-matrix rows
CHK_SCALE = 2.0 ** -64                # keeps huge-but-finite inputs from overflowing


def _round_up(x, m):
    return (x + m - 1) // m * m


def _build_selection_matrix():
    """(R_OUT, 51) constant matrix applied on the MXU inside the kernel.

    Row layout (groups of PG rows):
      group 0..2 : bone1 (dx, dy, dz) per pair  -> +1 at j1b, -1 at j1a
      group 3..5 : bone2 (dx, dy, dz) per pair  -> +1 at j2b, -1 at j2a
      group 6    : finiteness check: row r sums (scaled) every input row k with
                   k % PG == r, so together the 8 rows cover all 51 coords.
    Filler pair rows (p >= P) are all-zero -> zero bone length -> masked out.
    """
    sel = np.zeros((R_OUT, JC), np.float32)
    for p, ((j1a, j1b), (j2a, j2b)) in enumerate(BONE_PAIRS):
        for c in range(3):
            sel[c * PG + p, j1b * 3 + c] += 1.0
            sel[c * PG + p, j1a * 3 + c] -= 1.0
            sel[(3 + c) * PG + p, j2b * 3 + c] += 1.0
            sel[(3 + c) * PG + p, j2a * 3 + c] -= 1.0
    for k in range(JC):
        sel[6 * PG + (k % PG), k] = CHK_SCALE
    return sel


_SEL = _build_selection_matrix()


def _make_kernel(batch, tb):
    def kernel(sel_ref, x_ref, sum_ref, cnt_ref):
        i = pl.program_id(0)

        x = x_ref[...]                       # (51, tb) f32, batch on lanes
        sel = sel_ref[...]                   # (R_OUT, 51) f32, constant

        # Endpoint gather + subtraction as one small matmul on the idle MXU.
        # HIGHEST precision keeps the gathered differences ~f32-exact.
        d = jnp.dot(sel, x,
                    preferred_element_type=jnp.float32,
                    precision=jax.lax.Precision.HIGHEST)   # (R_OUT, tb)

        d1x, d1y, d1z = d[0 * PG:1 * PG], d[1 * PG:2 * PG], d[2 * PG:3 * PG]
        d2x, d2y, d2z = d[3 * PG:4 * PG], d[4 * PG:5 * PG], d[5 * PG:6 * PG]
        chk = d[6 * PG:7 * PG]               # finiteness-check rows

        s1 = d1x * d1x + d1y * d1y + d1z * d1z
        s2 = d2x * d2x + d2y * d2y + d2z * d2z
        len1 = jnp.sqrt(s1)
        len2 = jnp.sqrt(s2)
        ratio = len1 / (len2 + 1e-8)

        # Ragged-tail lane mask (last grid block may overrun the batch; those
        # lanes hold unspecified VMEM data, so they must be excluded from the
        # pair statistics AND the finiteness check).
        lane = jax.lax.broadcasted_iota(jnp.int32, (1, tb), 1)
        lane_ok = lane < (batch - i * tb)    # (1, tb), broadcasts over PG rows

        valid = ((len1 > 1e-6) & (len2 > 1e-6)
                 & (ratio < 10.0) & (ratio > 0.1) & lane_ok)
        err = jnp.where(valid, jnp.abs(ratio - 1.0), 0.0)

        # NaN/Inf poisoning: finite -> 0, Inf/NaN -> NaN (0 * Inf = NaN).
        poison = jnp.where(lane_ok, chk, 0.0) * 0.0

        sum_ref[0] = jnp.sum(err + poison, axis=1, keepdims=True)       # (PG, 1)
        cnt_ref[0] = jnp.sum(valid.astype(jnp.float32), axis=1, keepdims=True)

    return kernel


def bone_loss(pose_3d, *, lane_tile=8192):
    """pose_3d: (B, NUM_JOINTS, 3) float array -> scalar float32 loss."""
    B, J, C = pose_3d.shape
    assert C == 3 and J == NUM_JOINTS

    # Layout plumbing: reshape is free; one transpose puts batch on lanes.
    x = pose_3d.reshape(B, JC).astype(jnp.float32).T      # (51, B)

    tb = min(_round_up(max(int(lane_tile), 128), 128), _round_up(max(B, 1), 128))
    nt = pl.cdiv(B, tb)                                    # last block may be ragged

    sums, cnts = pl.pallas_call(
        _make_kernel(B, tb),
        out_shape=(jax.ShapeDtypeStruct((nt, PG, 1), jnp.float32),
                   jax.ShapeDtypeStruct((nt, PG, 1), jnp.float32)),
        grid_spec=pltpu.PrefetchScalarGridSpec(
            num_scalar_prefetch=0,
            grid=(nt,),
            in_specs=[pl.BlockSpec((R_OUT, JC), lambda i: (0, 0)),   # constant sel
                      pl.BlockSpec((JC, tb), lambda i: (0, i))],     # pose slab tile
            out_specs=[pl.BlockSpec((1, PG, 1), lambda i: (i, 0, 0)),
                       pl.BlockSpec((1, PG, 1), lambda i: (i, 0, 0))]),
        compiler_params=pltpu.CompilerParams(
            dimension_semantics=("parallel",),          # independent tiles (v7x 2-TC)
            vmem_limit_bytes=32 * 1024 * 1024),         # raise v5e's 16 MiB default
    )(jnp.asarray(_SEL), x)

    # Tiny epilogue reduction in plain JAX (nt * PG * 2 floats).
    sums = jnp.sum(sums[..., 0], axis=0)                 # (PG,) — NaN if input had NaN/Inf
    cnts = jnp.sum(cnts[..., 0], axis=0)                 # (PG,)
    pair_mask = jnp.arange(PG) < P
    contrib = jnp.where(pair_mask & (cnts > 0.0),
                        sums / jnp.maximum(cnts, 1.0), 0.0)
    loss = jnp.sum(contrib) / jnp.float32(P)
    finite_ok = jnp.all(jnp.isfinite(sums))
    return jnp.where(finite_ok, loss, jnp.float32(0.1))


def _reference_jax(pose_3d):
    # Plain-JAX reference mirroring the PyTorch semantics.
    loss = 0.0
    for (j1a, j1b), (j2a, j2b) in BONE_PAIRS:
        b1 = pose_3d[:, j1b] - pose_3d[:, j1a]
        b2 = pose_3d[:, j2b] - pose_3d[:, j2a]
        l1 = jnp.linalg.norm(b1, axis=1)
        l2 = jnp.linalg.norm(b2, axis=1)
        ratio = l1 / (l2 + 1e-8)
        valid = (l1 > 1e-6) & (l2 > 1e-6) & (ratio < 10.0) & (ratio > 0.1)
        cnt = jnp.sum(valid.astype(jnp.float32))
        s = jnp.sum(jnp.where(valid, jnp.abs(ratio - 1.0), 0.0))
        loss = loss + jnp.where(cnt > 0, s / jnp.maximum(cnt, 1.0), 0.0)
    loss = loss / len(BONE_PAIRS)
    bad = jnp.any(~jnp.isfinite(pose_3d))
    return jnp.where(bad, jnp.float32(0.1), loss)


if __name__ == "__main__":
    key = jax.random.PRNGKey(0)
    # Tolerances are kept loose only to be robust across MXU matmul-precision
    # lowering differences; with HIGHEST precision the observed error is ~1e-6.
    ATOL, RTOL = 2e-3, 1e-3

    # Small single-tile case (B=2): block wider than batch -> lane mask path.
    pose_small = jax.random.normal(key, (2, NUM_JOINTS, 3), dtype=jnp.float32)
    got = jax.block_until_ready(bone_loss(pose_small))
    want = _reference_jax(pose_small)
    assert jnp.allclose(got, want, atol=ATOL, rtol=RTOL), (got, want)

    # Multi-tile case: grid > 1, ragged tail (300 = 2*128 + 44), and one sample
    # with a degenerate (zero-length) bone exercising the validity mask.
    pose_big = jax.random.normal(jax.random.PRNGKey(1), (300, NUM_JOINTS, 3),
                                 dtype=jnp.float32)
    pose_big = pose_big.at[5, 2].set(pose_big[5, 1])      # joint2 == joint1
    got_big = jax.block_until_ready(bone_loss(pose_big, lane_tile=128))
    want_big = _reference_jax(pose_big)
    assert jnp.allclose(got_big, want_big, atol=ATOL, rtol=RTOL), (got_big, want_big)

    # Same input with the default (large-lane, single-tile) configuration.
    got_big2 = jax.block_until_ready(bone_loss(pose_big))
    assert jnp.allclose(got_big2, want_big, atol=ATOL, rtol=RTOL), (got_big2, want_big)

    # NaN guard: a non-finite value in a joint NOT used by any bone pair must
    # still trip the 0.1 early-exit (matches the PyTorch full-tensor check).
    pose_bad = pose_small.at[0, 9, 1].set(jnp.nan)
    got_bad = jax.block_until_ready(bone_loss(pose_bad))
    assert jnp.allclose(got_bad, jnp.float32(0.1)), got_bad

    # Inf guard, multi-tile path.
    pose_inf = pose_big.at[123, 7, 0].set(jnp.inf)
    got_inf = jax.block_until_ready(bone_loss(pose_inf, lane_tile=128))
    assert jnp.allclose(got_inf, jnp.float32(0.1)), got_inf

    print("KERNEL_OK")
</pallas_src>

<mosaic_0001>
module attributes {stable_mosaic.version = 11 : i64} {
  func.func @kernel(%arg0: i32, %arg1: memref<56x51xf32, #tpu.memory_space<vmem>>, %arg2: memref<51x128xf32, #tpu.memory_space<vmem>>, %arg3: memref<1x8x1xf32, #tpu.memory_space<vmem>>, %arg4: memref<1x8x1xf32, #tpu.memory_space<vmem>>) attributes {dimension_semantics = [#tpu.dimension_semantics<parallel>], iteration_bounds = array<i64: 1>, scalar_prefetch = 0 : i64, scratch_operands = 0 : i64, tpu.core_type = #tpu.core_type<tc>, window_params = [{pipeline_mode = #tpu.pipeline_mode<synchronous>, transform_indices = @transform_0, window_bounds = array<i64: 56, 51>}, {transform_indices = @transform_1, window_bounds = array<i64: 51, 128>}, {transform_indices = @transform_2, window_bounds = array<i64: 1, 8, 1>}, {transform_indices = @transform_3, window_bounds = array<i64: 1, 8, 1>}]} {
    %c0 = arith.constant 0 : index
    %c0_0 = arith.constant 0 : index
    %0 = vector.load %arg2[%c0, %c0_0] : memref<51x128xf32, #tpu.memory_space<vmem>>, vector<51x128xf32>
    %c0_1 = arith.constant 0 : index
    %c0_2 = arith.constant 0 : index
    %1 = vector.load %arg1[%c0_1, %c0_2] : memref<56x51xf32, #tpu.memory_space<vmem>>, vector<56x51xf32>
    %cst = arith.constant dense<0.000000e+00> : vector<56x128xf32>
    %2 = tpu.matmul %1, %0, %cst {dimension_numbers = #tpu.dot_dimension_numbers<[1], [0], [0], [1], [0, 0, 1, 1], [], []>, precision = #tpu.contract_precision<fp32>} : vector<56x51xf32>, vector<51x128xf32>, vector<56x128xf32> -> vector<56x128xf32>
    %3 = vector.extract_strided_slice %2 {offsets = [0, 0], sizes = [8, 128], strides = [1, 1]} : vector<56x128xf32> to vector<8x128xf32>
    %4 = vector.extract_strided_slice %2 {offsets = [8, 0], sizes = [8, 128], strides = [1, 1]} : vector<56x128xf32> to vector<8x128xf32>
    %5 = vector.extract_strided_slice %2 {offsets = [16, 0], sizes = [8, 128], strides = [1, 1]} : vector<56x128xf32> to vector<8x128xf32>
    %6 = vector.extract_strided_slice %2 {offsets = [24, 0], sizes = [8, 128], strides = [1, 1]} : vector<56x128xf32> to vector<8x128xf32>
    %7 = vector.extract_strided_slice %2 {offsets = [32, 0], sizes = [8, 128], strides = [1, 1]} : vector<56x128xf32> to vector<8x128xf32>
    %8 = vector.extract_strided_slice %2 {offsets = [40, 0], sizes = [8, 128], strides = [1, 1]} : vector<56x128xf32> to vector<8x128xf32>
    %9 = vector.extract_strided_slice %2 {offsets = [48, 0], sizes = [8, 128], strides = [1, 1]} : vector<56x128xf32> to vector<8x128xf32>
    %10 = arith.mulf %3, %3 : vector<8x128xf32>
    %11 = arith.mulf %4, %4 : vector<8x128xf32>
    %12 = arith.addf %10, %11 : vector<8x128xf32>
    %13 = arith.mulf %5, %5 : vector<8x128xf32>
    %14 = arith.addf %12, %13 : vector<8x128xf32>
    %15 = arith.mulf %6, %6 : vector<8x128xf32>
    %16 = arith.mulf %7, %7 : vector<8x128xf32>
    %17 = arith.addf %15, %16 : vector<8x128xf32>
    %18 = arith.mulf %8, %8 : vector<8x128xf32>
    %19 = arith.addf %17, %18 : vector<8x128xf32>
    %20 = math.sqrt %14 : vector<8x128xf32>
    %21 = math.sqrt %19 : vector<8x128xf32>
    %cst_3 = arith.constant 9.99999993E-9 : f32
    %22 = vector.broadcast %cst_3 : f32 to vector<8x128xf32>
    %23 = arith.addf %21, %22 : vector<8x128xf32>
    %24 = arith.divf %20, %23 : vector<8x128xf32>
    %25 = tpu.iota {dimensions = array<i32: 1>} : vector<1x128xi32>
    %c128_i32 = arith.constant 128 : i32
    %26 = arith.muli %arg0, %c128_i32 : i32
    %c2_i32 = arith.constant 2 : i32
    %27 = arith.subi %c2_i32, %26 : i32
    %28 = vector.broadcast %27 : i32 to vector<1x128xi32>
    %29 = arith.cmpi slt, %25, %28 : vector<1x128xi32>
    %cst_4 = arith.constant 9.99999997E-7 : f32
    %30 = vector.broadcast %cst_4 : f32 to vector<8x128xf32>
    %31 = arith.cmpf ogt, %20, %30 : vector<8x128xf32>
    %cst_5 = arith.constant 9.99999997E-7 : f32
    %32 = vector.broadcast %cst_5 : f32 to vector<8x128xf32>
    %33 = arith.cmpf ogt, %21, %32 : vector<8x128xf32>
    %34 = arith.andi %31, %33 : vector<8x128xi1>
    %cst_6 = arith.constant 1.000000e+01 : f32
    %35 = vector.broadcast %cst_6 : f32 to vector<8x128xf32>
    %36 = arith.cmpf olt, %24, %35 : vector<8x128xf32>
    %37 = arith.andi %34, %36 : vector<8x128xi1>
    %cst_7 = arith.constant 1.000000e-01 : f32
    %38 = vector.broadcast %cst_7 : f32 to vector<8x128xf32>
    %39 = arith.cmpf ogt, %24, %38 : vector<8x128xf32>
    %40 = arith.andi %37, %39 : vector<8x128xi1>
    %41 = vector.broadcast %29 : vector<1x128xi1> to vector<8x128xi1>
    %42 = arith.andi %40, %41 : vector<8x128xi1>
    %cst_8 = arith.constant 1.000000e+00 : f32
    %43 = vector.broadcast %cst_8 : f32 to vector<8x128xf32>
    %44 = arith.subf %24, %43 : vector<8x128xf32>
    %45 = math.absf %44 : vector<8x128xf32>
    %cst_9 = arith.constant 0.000000e+00 : f32
    %46 = vector.broadcast %cst_9 : f32 to vector<8x128xf32>
    %47 = arith.select %42, %45, %46 : vector<8x128xi1>, vector<8x128xf32>
    %cst_10 = arith.constant 0.000000e+00 : f32
    %48 = vector.shape_cast %29 : vector<1x128xi1> to vector<1x128xi1>
    %49 = vector.broadcast %48 : vector<1x128xi1> to vector<8x128xi1>
    %50 = vector.broadcast %cst_10 : f32 to vector<8x128xf32>
    %51 = arith.select %49, %9, %50 : vector<8x128xi1>, vector<8x128xf32>
    %cst_11 = arith.constant 0.000000e+00 : f32
    %52 = vector.broadcast %cst_11 : f32 to vector<8x128xf32>
    %53 = arith.mulf %51, %52 : vector<8x128xf32>
    %54 = arith.addf %47, %53 : vector<8x128xf32>
    %cst_12 = arith.constant dense<0.000000e+00> : vector<8xf32>
    %55 = vector.multi_reduction <add>, %54, %cst_12 [1] : vector<8x128xf32> to vector<8xf32>
    %56 = vector.shape_cast %55 : vector<8xf32> to vector<8x1xf32>
    %c0_13 = arith.constant 0 : index
    %c0_14 = arith.constant 0 : index
    %c0_15 = arith.constant 0 : index
    %57 = vector.load %arg3[%c0_13, %c0_14, %c0_15] : memref<1x8x1xf32, #tpu.memory_space<vmem>>, vector<1x8x1xf32>
    %58 = vector.shape_cast %57 : vector<1x8x1xf32> to vector<8x1xf32>
    %59 = vector.shape_cast %56 : vector<8x1xf32> to vector<1x8x1xf32>
    tpu.vector_store %arg3[%c0_13, %c0_14, %c0_15], %59 {strides = array<i32>} : memref<1x8x1xf32, #tpu.memory_space<vmem>>, vector<1x8x1xf32>,
    %60 = arith.extui %42 : vector<8x128xi1> to vector<8x128xi32>
    %61 = arith.sitofp %60 : vector<8x128xi32> to vector<8x128xf32>
    %cst_16 = arith.constant dense<0.000000e+00> : vector<8xf32>
    %62 = vector.multi_reduction <add>, %61, %cst_16 [1] : vector<8x128xf32> to vector<8xf32>
    %63 = vector.shape_cast %62 : vector<8xf32> to vector<8x1xf32>
    %c0_17 = arith.constant 0 : index
    %c0_18 = arith.constant 0 : index
    %c0_19 = arith.constant 0 : index
    %64 = vector.load %arg4[%c0_17, %c0_18, %c0_19] : memref<1x8x1xf32, #tpu.memory_space<vmem>>, vector<1x8x1xf32>
    %65 = vector.shape_cast %64 : vector<1x8x1xf32> to vector<8x1xf32>
    %66 = vector.shape_cast %63 : vector<8x1xf32> to vector<1x8x1xf32>
    tpu.vector_store %arg4[%c0_17, %c0_18, %c0_19], %66 {strides = array<i32>} : memref<1x8x1xf32, #tpu.memory_space<vmem>>, vector<1x8x1xf32>,
    return
  }
  func.func @transform_0(%arg0: i32) -> (i32, i32) {
    %c0_i32 = arith.constant 0 : i32
    %c0_i32_0 = arith.constant 0 : i32
    %c0_i32_1 = arith.constant 0 : i32
    return %c0_i32, %c0_i32_0 : i32, i32
  }
  func.func @transform_1(%arg0: i32) -> (i32, i32) {
    %c0_i32 = arith.constant 0 : i32
    %c0_i32_0 = arith.constant 0 : i32
    return %c0_i32, %arg0 : i32, i32
  }
  func.func @transform_2(%arg0: i32) -> (i32, i32, i32) {
    %c0_i32 = arith.constant 0 : i32
    %c0_i32_0 = arith.constant 0 : i32
    %c0_i32_1 = arith.constant 0 : i32
    return %arg0, %c0_i32, %c0_i32_0 : i32, i32, i32
  }
  func.func @transform_3(%arg0: i32) -> (i32, i32, i32) {
    %c0_i32 = arith.constant 0 : i32
    %c0_i32_0 = arith.constant 0 : i32
    %c0_i32_1 = arith.constant 0 : i32
    return %arg0, %c0_i32, %c0_i32_0 : i32, i32, i32
  }
}

</mosaic_0001>

<llo_original>
// kernel: tpu_custom_call.1
$region0: #{tpu_custom_call.1}
  #allocation0 [shape = 'u32[]', space=smem, size = 0x4, offset = 0x4, fixed_abs, tag = 'smem constant byte address 0x4 - core index']
  #allocation1 [shape = 'u32[72,128]{1,0:T(1,128)}', space=vmem, size = 0x9000, scoped, tag = 'internal scratch']
  %s0 = inlined_call_operand.vmem [shape: f32[56,51], index: 0, kind: input, shape index: {}]
  %s1 = inlined_call_operand.vmem [shape: f32[51,2], index: 1, kind: input, shape index: {}]
  %s2 = inlined_call_operand.vmem [shape: f32[1,8,1], index: 2, kind: output, shape index: {0}]
  %s3 = inlined_call_operand.vmem [shape: f32[1,8,1], index: 3, kind: output, shape index: {1}]
  %4 = xla_tuple %s2, %s3
  %s5 = sld [smem:[#allocation0]]
  $region26: #{tpu_custom_call.1} parent=0
    _
  %s7 = ssub.s32 1, %s5
  %s8 = scalar_select 0, %s7, %s5
  // Predicated region
  $region2: #{tpu_custom_call.1} parent=0 // pred_check
    _
  $region3: #{tpu_custom_call.1} parent=0 // pred_check_branch
    %10 = sbr.rel (0) target = $region5
  $region4: #{tpu_custom_call.1} parent=0 // pred_region
    _
  $region5: #{tpu_custom_call.1} parent=0 // pred_fallthru
    _
  // Predicated region
  $region6: #{tpu_custom_call.1} parent=0 // pred_check
    _
  $region7: #{tpu_custom_call.1} parent=0 // pred_check_branch
    %12 = sbr.rel (0) target = $region9
  $region8: #{tpu_custom_call.1} parent=0 // pred_region
    _
  $region9: #{tpu_custom_call.1} parent=0 // pred_fallthru
    _
  %v13 = vld [vmem:[%s1] sm:$0xff]
  %v14 = vld [vmem:[%s1 + $0x8] sm:$0xff]
  %v15 = vld [vmem:[%s1 + $0x10] sm:$0xff]
  %v16 = vld [vmem:[%s1 + $0x18] sm:$0xff]
  %v17 = vld [vmem:[%s1 + $0x20] sm:$0xff]
  %v18 = vld [vmem:[%s1 + $0x28] sm:$0xff]
  %v19 = vld [vmem:[%s1 + $0x30] sm:$0x7]
  %v20 = vld [vmem:[%s0] sm:$0xff]
  %v21 = vld [vmem:[%s0 + $0x8] sm:$0xff]
  %v22 = vld [vmem:[%s0 + $0x10] sm:$0xff]
  %v23 = vld [vmem:[%s0 + $0x18] sm:$0xff]
  %v24 = vld [vmem:[%s0 + $0x20] sm:$0xff]
  %v25 = vld [vmem:[%s0 + $0x28] sm:$0xff]
  %v26 = vld [vmem:[%s0 + $0x30] sm:$0xff]
  %vm27 = vcmask 416768
  %v29 = vsel %vm27, %v20, 0
  %v32 = vsel %vm27, %v21, 0
  %v35 = vsel %vm27, %v22, 0
  %v38 = vsel %vm27, %v23, 0
  %v41 = vsel %vm27, %v24, 0
  %v44 = vsel %vm27, %v25, 0
  %v47 = vsel %vm27, %v26, 0
  %vm49 = vcmask 1042432
  %v51 = vsel %vm49, %v19, 0
  %53 = vmatpush.msra.mxu0 0.0
  %54 = vmatpush.msra.mxu0 0.0
  %55 = vmatpush.msra.mxu0 0.0
  %56 = vmatpush.msra.mxu0 0.0
  %57 = vmatpush.msra.mxu0 0.0
  %58 = vmatpush.msra.mxu0 0.0
  %59 = vmatpush.msra.mxu0 0.0
  %60 = vmatpush.msra.mxu0 0.0
  %61 = vmatpush.msra.mxu0 0.0
  %v62 = vand.u32 %v51, 4294901760
  %63 = vmatpush.msra.mxu0 %v62
  %v64 = vand.u32 %v18, 4294901760
  %65 = vmatpush.msra.mxu0 %v64
  %v66 = vand.u32 %v17, 4294901760
  %67 = vmatpush.msra.mxu0 %v66
  %v68 = vand.u32 %v16, 4294901760
  %69 = vmatpush.msra.mxu0 %v68
  %v70 = vand.u32 %v15, 4294901760
  %71 = vmatpush.msra.mxu0 %v70
  %v72 = vand.u32 %v14, 4294901760
  %73 = vmatpush.msra.mxu0 %v72
  %v74 = vand.u32 %v13, 4294901760
  %75 = vmatpush.msra.mxu0 %v74
  %v76 = vand.u32 %v29, 4294901760
  %v77 = vsub.f32 %v29, %v76
  %v78 = vand.u32 %v77, 4294901760
  %v79 = vsub.f32 %v77, %v78
  %v80 = vand.u32 %v79, 4294901760
  %81 = vmatmul.f32.gmra.mxu0 %v80
  %v82 = vpop.f32.mrf.mxu0
  %v83 = vadd.f32 0.0, %v82
  %v84 = vand.u32 %v32, 4294901760
  %v85 = vsub.f32 %v32, %v84
  %v86 = vand.u32 %v85, 4294901760
  %v87 = vsub.f32 %v85, %v86
  %v88 = vand.u32 %v87, 4294901760
  %89 = vmatmul.f32.gmra.mxu0 %v88
  %v90 = vpop.f32.mrf.mxu0
  %v91 = vadd.f32 0.0, %v90
  %v92 = vand.u32 %v35, 4294901760
  %v93 = vsub.f32 %v35, %v92
  %v94 = vand.u32 %v93, 4294901760
  %v95 = vsub.f32 %v93, %v94
  %v96 = vand.u32 %v95, 4294901760
  %97 = vmatmul.f32.gmra.mxu0 %v96
  %v98 = vpop.f32.mrf.mxu0
  %v99 = vadd.f32 0.0, %v98
  %v100 = vand.u32 %v38, 4294901760
  %v101 = vsub.f32 %v38, %v100
  %v102 = vand.u32 %v101, 4294901760
  %v103 = vsub.f32 %v101, %v102
  %v104 = vand.u32 %v103, 4294901760
  %105 = vmatmul.f32.gmra.mxu0 %v104
  %v106 = vpop.f32.mrf.mxu0
  %v107 = vadd.f32 0.0, %v106
  %v108 = vand.u32 %v41, 4294901760
  %v109 = vsub.f32 %v41, %v108
  %v110 = vand.u32 %v109, 4294901760
  %v111 = vsub.f32 %v109, %v110
  %v112 = vand.u32 %v111, 4294901760
  %113 = vmatmul.f32.gmra.mxu0 %v112
  %v114 = vpop.f32.mrf.mxu0
  %v115 = vadd.f32 0.0, %v114
  %v116 = vand.u32 %v44, 4294901760
  %v117 = vsub.f32 %v44, %v116
  %v118 = vand.u32 %v117, 4294901760
  %v119 = vsub.f32 %v117, %v118
  %v120 = vand.u32 %v119, 4294901760
  %121 = vmatmul.f32.gmra.mxu0 %v120
  %v122 = vpop.f32.mrf.mxu0
  %v123 = vadd.f32 0.0, %v122
  %v124 = vand.u32 %v47, 4294901760
  %v125 = vsub.f32 %v47, %v124
  %v126 = vand.u32 %v125, 4294901760
  %v127 = vsub.f32 %v125, %v126
  %v128 = vand.u32 %v127, 4294901760
  %129 = vmatmul.f32.gmra.mxu0 %v128
  %v130 = vpop.f32.mrf.mxu0
  %v131 = vadd.f32 0.0, %v130
  %132 = vdwg.mxu0
  %133 = vmatpush.msra.mxu0 0.0
  %134 = vmatpush.msra.mxu0 0.0
  %135 = vmatpush.msra.mxu0 0.0
  %136 = vmatpush.msra.mxu0 0.0
  %137 = vmatpush.msra.mxu0 0.0
  %138 = vmatpush.msra.mxu0 0.0
  %139 = vmatpush.msra.mxu0 0.0
  %140 = vmatpush.msra.mxu0 0.0
  %141 = vmatpush.msra.mxu0 0.0
  %v142 = vand.u32 %v51, 4294901760
  %v143 = vsub.f32 %v51, %v142
  %v144 = vand.u32 %v143, 4294901760
  %v145 = vsub.f32 %v143, %v144
  %v146 = vand.u32 %v145, 4294901760
  %147 = vmatpush.msra.mxu0 %v146
  %v148 = vand.u32 %v18, 4294901760
  %v149 = vsub.f32 %v18, %v148
  %v150 = vand.u32 %v149, 4294901760
  %v151 = vsub.f32 %v149, %v150
  %v152 = vand.u32 %v151, 4294901760
  %153 = vmatpush.msra.mxu0 %v152
  %v154 = vand.u32 %v17, 4294901760
  %v155 = vsub.f32 %v17, %v154
  %v156 = vand.u32 %v155, 4294901760
  %v157 = vsub.f32 %v155, %v156
  %v158 = vand.u32 %v157, 4294901760
  %159 = vmatpush.msra.mxu0 %v158
  %v160 = vand.u32 %v16, 4294901760
  %v161 = vsub.f32 %v16, %v160
  %v162 = vand.u32 %v161, 4294901760
  %v163 = vsub.f32 %v161, %v162
  %v164 = vand.u32 %v163, 4294901760
  %165 = vmatpush.msra.mxu0 %v164
  %v166 = vand.u32 %v15, 4294901760
  %v167 = vsub.f32 %v15, %v166
  %v168 = vand.u32 %v167, 4294901760
  %v169 = vsub.f32 %v167, %v168
  %v170 = vand.u32 %v169, 4294901760
  %171 = vmatpush.msra.mxu0 %v170
  %v172 = vand.u32 %v14, 4294901760
  %v173 = vsub.f32 %v14, %v172
  %v174 = vand.u32 %v173, 4294901760
  %v175 = vsub.f32 %v173, %v174
  %v176 = vand.u32 %v175, 4294901760
  %177 = vmatpush.msra.mxu0 %v176
  %v178 = vand.u32 %v13, 4294901760
  %v179 = vsub.f32 %v13, %v178
  %v180 = vand.u32 %v179, 4294901760
  %v181 = vsub.f32 %v179, %v180
  %v182 = vand.u32 %v181, 4294901760
  %183 = vmatpush.msra.mxu0 %v182
  %v184 = vand.u32 %v29, 4294901760
  %185 = vmatmul.f32.gmra.mxu0 %v184
  %v186 = vpop.f32.mrf.mxu0
  %v187 = vadd.f32 %v83, %v186
  %v188 = vand.u32 %v32, 4294901760
  %189 = vmatmul.f32.gmra.mxu0 %v188
  %v190 = vpop.f32.mrf.mxu0
  %v191 = vadd.f32 %v91, %v190
  %v192 = vand.u32 %v35, 4294901760
  %193 = vmatmul.f32.gmra.mxu0 %v192
  %v194 = vpop.f32.mrf.mxu0
  %v195 = vadd.f32 %v99, %v194
  %v196 = vand.u32 %v38, 4294901760
  %197 = vmatmul.f32.gmra.mxu0 %v196
  %v198 = vpop.f32.mrf.mxu0
  %v199 = vadd.f32 %v107, %v198
  %v200 = vand.u32 %v41, 4294901760
  %201 = vmatmul.f32.gmra.mxu0 %v200
  %v202 = vpop.f32.mrf.mxu0
  %v203 = vadd.f32 %v115, %v202
  %v204 = vand.u32 %v44, 4294901760
  %205 = vmatmul.f32.gmra.mxu0 %v204
  %v206 = vpop.f32.mrf.mxu0
  %v207 = vadd.f32 %v123, %v206
  %v208 = vand.u32 %v47, 4294901760
  %209 = vmatmul.f32.gmra.mxu0 %v208
  %v210 = vpop.f32.mrf.mxu0
  %v211 = vadd.f32 %v131, %v210
  %212 = vdwg.mxu0
  %213 = vmatpush.msra.mxu0 0.0
  %214 = vmatpush.msra.mxu0 0.0
  %215 = vmatpush.msra.mxu0 0.0
  %216 = vmatpush.msra.mxu0 0.0
  %217 = vmatpush.msra.mxu0 0.0
  %218 = vmatpush.msra.mxu0 0.0
  %219 = vmatpush.msra.mxu0 0.0
  %220 = vmatpush.msra.mxu0 0.0
  %221 = vmatpush.msra.mxu0 0.0
  %v222 = vand.u32 %v51, 4294901760
  %v223 = vsub.f32 %v51, %v222
  %224 = vmatpush.msra.mxu0 %v223
  %v225 = vand.u32 %v18, 4294901760
  %v226 = vsub.f32 %v18, %v225
  %227 = vmatpush.msra.mxu0 %v226
  %v228 = vand.u32 %v17, 4294901760
  %v229 = vsub.f32 %v17, %v228
  %230 = vmatpush.msra.mxu0 %v229
  %v231 = vand.u32 %v16, 4294901760
  %v232 = vsub.f32 %v16, %v231
  %233 = vmatpush.msra.mxu0 %v232
  %v234 = vand.u32 %v15, 4294901760
  %v235 = vsub.f32 %v15, %v234
  %236 = vmatpush.msra.mxu0 %v235
  %v237 = vand.u32 %v14, 4294901760
  %v238 = vsub.f32 %v14, %v237
  %239 = vmatpush.msra.mxu0 %v238
  %v240 = vand.u32 %v13, 4294901760
  %v241 = vsub.f32 %v13, %v240
  %242 = vmatpush.msra.mxu0 %v241
  %v243 = vand.u32 %v29, 4294901760
  %v244 = vsub.f32 %v29, %v243
  %245 = vmatmul.f32.gmra.mxu0 %v244
  %v246 = vpop.f32.mrf.mxu0
  %v247 = vadd.f32 %v187, %v246
  %v248 = vand.u32 %v32, 4294901760
  %v249 = vsub.f32 %v32, %v248
  %250 = vmatmul.f32.gmra.mxu0 %v249
  %v251 = vpop.f32.mrf.mxu0
  %v252 = vadd.f32 %v191, %v251
  %v253 = vand.u32 %v35, 4294901760
  %v254 = vsub.f32 %v35, %v253
  %255 = vmatmul.f32.gmra.mxu0 %v254
  %v256 = vpop.f32.mrf.mxu0
  %v257 = vadd.f32 %v195, %v256
  %v258 = vand.u32 %v38, 4294901760
  %v259 = vsub.f32 %v38, %v258
  %260 = vmatmul.f32.gmra.mxu0 %v259
  %v261 = vpop.f32.mrf.mxu0
  %v262 = vadd.f32 %v199, %v261
  %v263 = vand.u32 %v41, 4294901760
  %v264 = vsub.f32 %v41, %v263
  %265 = vmatmul.f32.gmra.mxu0 %v264
  %v266 = vpop.f32.mrf.mxu0
  %v267 = vadd.f32 %v203, %v266
  %v268 = vand.u32 %v44, 4294901760
  %v269 = vsub.f32 %v44, %v268
  %270 = vmatmul.f32.gmra.mxu0 %v269
  %v271 = vpop.f32.mrf.mxu0
  %v272 = vadd.f32 %v207, %v271
  %v273 = vand.u32 %v47, 4294901760
  %v274 = vsub.f32 %v47, %v273
  %275 = vmatmul.f32.gmra.mxu0 %v274
  %v276 = vpop.f32.mrf.mxu0
  %v277 = vadd.f32 %v211, %v276
  %278 = vdwg.mxu0
  %279 = vmatpush.msra.mxu0 0.0
  %280 = vmatpush.msra.mxu0 0.0
  %281 = vmatpush.msra.mxu0 0.0
  %282 = vmatpush.msra.mxu0 0.0
  %283 = vmatpush.msra.mxu0 0.0
  %284 = vmatpush.msra.mxu0 0.0
  %285 = vmatpush.msra.mxu0 0.0
  %286 = vmatpush.msra.mxu0 0.0
  %287 = vmatpush.msra.mxu0 0.0
  %v288 = vand.u32 %v51, 4294901760
  %289 = vmatpush.msra.mxu0 %v288
  %v290 = vand.u32 %v18, 4294901760
  %291 = vmatpush.msra.mxu0 %v290
  %v292 = vand.u32 %v17, 4294901760
  %293 = vmatpush.msra.mxu0 %v292
  %v294 = vand.u32 %v16, 4294901760
  %295 = vmatpush.msra.mxu0 %v294
  %v296 = vand.u32 %v15, 4294901760
  %297 = vmatpush.msra.mxu0 %v296
  %v298 = vand.u32 %v14, 4294901760
  %299 = vmatpush.msra.mxu0 %v298
  %v300 = vand.u32 %v13, 4294901760
  %301 = vmatpush.msra.mxu0 %v300
  %v302 = vand.u32 %v29, 4294901760
  %v303 = vsub.f32 %v29, %v302
  %v304 = vand.u32 %v303, 4294901760
  %305 = vmatmul.f32.gmra.mxu0 %v304
  %v306 = vpop.f32.mrf.mxu0
  %v307 = vadd.f32 %v247, %v306
  %v308 = vand.u32 %v32, 4294901760
  %v309 = vsub.f32 %v32, %v308
  %v310 = vand.u32 %v309, 4294901760
  %311 = vmatmul.f32.gmra.mxu0 %v310
  %v312 = vpop.f32.mrf.mxu0
  %v313 = vadd.f32 %v252, %v312
  %v314 = vand.u32 %v35, 4294901760
  %v315 = vsub.f32 %v35, %v314
  %v316 = vand.u32 %v315, 4294901760
  %317 = vmatmul.f32.gmra.mxu0 %v316
  %v318 = vpop.f32.mrf.mxu0
  %v319 = vadd.f32 %v257, %v318
  %v320 = vand.u32 %v38, 4294901760
  %v321 = vsub.f32 %v38, %v320
  %v322 = vand.u32 %v321, 4294901760
  %323 = vmatmul.f32.gmra.mxu0 %v322
  %v324 = vpop.f32.mrf.mxu0
  %v325 = vadd.f32 %v262, %v324
  %v326 = vand.u32 %v41, 4294901760
  %v327 = vsub.f32 %v41, %v326
  %v328 = vand.u32 %v327, 4294901760
  %329 = vmatmul.f32.gmra.mxu0 %v328
  %v330 = vpop.f32.mrf.mxu0
  %v331 = vadd.f32 %v267, %v330
  %v332 = vand.u32 %v44, 4294901760
  %v333 = vsub.f32 %v44, %v332
  %v334 = vand.u32 %v333, 4294901760
  %335 = vmatmul.f32.gmra.mxu0 %v334
  %v336 = vpop.f32.mrf.mxu0
  %v337 = vadd.f32 %v272, %v336
  %v338 = vand.u32 %v47, 4294901760
  %v339 = vsub.f32 %v47, %v338
  %v340 = vand.u32 %v339, 4294901760
  %341 = vmatmul.f32.gmra.mxu0 %v340
  %v342 = vpop.f32.mrf.mxu0
  %v343 = vadd.f32 %v277, %v342
  %344 = vdwg.mxu0
  %345 = vmatpush.msra.mxu0 0.0
  %346 = vmatpush.msra.mxu0 0.0
  %347 = vmatpush.msra.mxu0 0.0
  %348 = vmatpush.msra.mxu0 0.0
  %349 = vmatpush.msra.mxu0 0.0
  %350 = vmatpush.msra.mxu0 0.0
  %351 = vmatpush.msra.mxu0 0.0
  %352 = vmatpush.msra.mxu0 0.0
  %353 = vmatpush.msra.mxu0 0.0
  %v354 = vand.u32 %v51, 4294901760
  %v355 = vsub.f32 %v51, %v354
  %v356 = vand.u32 %v355, 4294901760
  %357 = vmatpush.msra.mxu0 %v356
  %v358 = vand.u32 %v18, 4294901760
  %v359 = vsub.f32 %v18, %v358
  %v360 = vand.u32 %v359, 4294901760
  %361 = vmatpush.msra.mxu0 %v360
  %v362 = vand.u32 %v17, 4294901760
  %v363 = vsub.f32 %v17, %v362
  %v364 = vand.u32 %v363, 4294901760
  %365 = vmatpush.msra.mxu0 %v364
  %v366 = vand.u32 %v16, 4294901760
  %v367 = vsub.f32 %v16, %v366
  %v368 = vand.u32 %v367, 4294901760
  %369 = vmatpush.msra.mxu0 %v368
  %v370 = vand.u32 %v15, 4294901760
  %v371 = vsub.f32 %v15, %v370
  %v372 = vand.u32 %v371, 4294901760
  %373 = vmatpush.msra.mxu0 %v372
  %v374 = vand.u32 %v14, 4294901760
  %v375 = vsub.f32 %v14, %v374
  %v376 = vand.u32 %v375, 4294901760
  %377 = vmatpush.msra.mxu0 %v376
  %v378 = vand.u32 %v13, 4294901760
  %v379 = vsub.f32 %v13, %v378
  %v380 = vand.u32 %v379, 4294901760
  %381 = vmatpush.msra.mxu0 %v380
  %v382 = vand.u32 %v29, 4294901760
  %383 = vmatmul.f32.gmra.mxu0 %v382
  %v384 = vpop.f32.mrf.mxu0
  %v385 = vadd.f32 %v307, %v384
  %v386 = vand.u32 %v32, 4294901760
  %387 = vmatmul.f32.gmra.mxu0 %v386
  %v388 = vpop.f32.mrf.mxu0
  %v389 = vadd.f32 %v313, %v388
  %v390 = vand.u32 %v35, 4294901760
  %391 = vmatmul.f32.gmra.mxu0 %v390
  %v392 = vpop.f32.mrf.mxu0
  %v393 = vadd.f32 %v319, %v392
  %v394 = vand.u32 %v38, 4294901760
  %395 = vmatmul.f32.gmra.mxu0 %v394
  %v396 = vpop.f32.mrf.mxu0
  %v397 = vadd.f32 %v325, %v396
  %v398 = vand.u32 %v41, 4294901760
  %399 = vmatmul.f32.gmra.mxu0 %v398
  %v400 = vpop.f32.mrf.mxu0
  %v401 = vadd.f32 %v331, %v400
  %v402 = vand.u32 %v44, 4294901760
  %403 = vmatmul.f32.gmra.mxu0 %v402
  %v404 = vpop.f32.mrf.mxu0
  %v405 = vadd.f32 %v337, %v404
  %v406 = vand.u32 %v47, 4294901760
  %407 = vmatmul.f32.gmra.mxu0 %v406
  %v408 = vpop.f32.mrf.mxu0
  %v409 = vadd.f32 %v343, %v408
  %410 = vdwg.mxu0
  %411 = vmatpush.msra.mxu0 0.0
  %412 = vmatpush.msra.mxu0 0.0
  %413 = vmatpush.msra.mxu0 0.0
  %414 = vmatpush.msra.mxu0 0.0
  %415 = vmatpush.msra.mxu0 0.0
  %416 = vmatpush.msra.mxu0 0.0
  %417 = vmatpush.msra.mxu0 0.0
  %418 = vmatpush.msra.mxu0 0.0
  %419 = vmatpush.msra.mxu0 0.0
  %v420 = vand.u32 %v51, 4294901760
  %421 = vmatpush.msra.mxu0 %v420
  %v422 = vand.u32 %v18, 4294901760
  %423 = vmatpush.msra.mxu0 %v422
  %v424 = vand.u32 %v17, 4294901760
  %425 = vmatpush.msra.mxu0 %v424
  %v426 = vand.u32 %v16, 4294901760
  %427 = vmatpush.msra.mxu0 %v426
  %v428 = vand.u32 %v15, 4294901760
  %429 = vmatpush.msra.mxu0 %v428
  %v430 = vand.u32 %v14, 4294901760
  %431 = vmatpush.msra.mxu0 %v430
  %v432 = vand.u32 %v13, 4294901760
  %433 = vmatpush.msra.mxu0 %v432
  %v434 = vand.u32 %v29, 4294901760
  %435 = vmatmul.f32.gmra.mxu0 %v434
  %v436 = vpop.f32.mrf.mxu0
  %v437 = vadd.f32 %v385, %v436
  %v438 = vand.u32 %v32, 4294901760
  %439 = vmatmul.f32.gmra.mxu0 %v438
  %v440 = vpop.f32.mrf.mxu0
  %v441 = vadd.f32 %v389, %v440
  %v442 = vand.u32 %v35, 4294901760
  %443 = vmatmul.f32.gmra.mxu0 %v442
  %v444 = vpop.f32.mrf.mxu0
  %v445 = vadd.f32 %v393, %v444
  %v446 = vand.u32 %v38, 4294901760
  %447 = vmatmul.f32.gmra.mxu0 %v446
  %v448 = vpop.f32.mrf.mxu0
  %v449 = vadd.f32 %v397, %v448
  %v450 = vand.u32 %v41, 4294901760
  %451 = vmatmul.f32.gmra.mxu0 %v450
  %v452 = vpop.f32.mrf.mxu0
  %v453 = vadd.f32 %v401, %v452
  %v454 = vand.u32 %v44, 4294901760
  %455 = vmatmul.f32.gmra.mxu0 %v454
  %v456 = vpop.f32.mrf.mxu0
  %v457 = vadd.f32 %v405, %v456
  %v458 = vand.u32 %v47, 4294901760
  %459 = vmatmul.f32.gmra.mxu0 %v458
  %v460 = vpop.f32.mrf.mxu0
  %v461 = vadd.f32 %v409, %v460
  %462 = vdwg.mxu0
  %v463 = vmul.f32 %v437, %v437
  %v464 = vmul.f32 %v441, %v441
  %v465 = vadd.f32 %v463, %v464
  %v466 = vmul.f32 %v445, %v445
  %v467 = vadd.f32 %v465, %v466
  %v468 = vmul.f32 %v449, %v449
  %v469 = vmul.f32 %v453, %v453
  %v470 = vadd.f32 %v468, %v469
  %v471 = vmul.f32 %v457, %v457
  %v472 = vadd.f32 %v470, %v471
  %v473 = vrsqrt.pop %v467
  %v474 = vmul.f32 %v473, %v467
  %v475 = vmul.f32 %v474, %v473
  %v476 = vmul.f32 0.5, %v475
  %v477 = vsub.f32 1.5, %v476
  %v478 = vmul.f32 %v473, %v477
  %v479 = vmul.f32 %v467, %v478
  %vm480 = vcmp.eq.f32.partialorder %v467, inf
  %v481 = vsel %vm480, %v467, %v479
  %vm482 = vcmp.eq.f32.partialorder %v467, 0.0
  %v483 = vand.u32 %v467, 2147483648
  %v484 = vsel %vm482, %v483, %v481
  %v485 = vrsqrt.pop %v472
  %v486 = vmul.f32 %v485, %v472
  %v487 = vmul.f32 %v486, %v485
  %v488 = vmul.f32 0.5, %v487
  %v489 = vsub.f32 1.5, %v488
  %v490 = vmul.f32 %v485, %v489
  %v491 = vmul.f32 %v472, %v490
  %vm492 = vcmp.eq.f32.partialorder %v472, inf
  %v493 = vsel %vm492, %v472, %v491
  %vm494 = vcmp.eq.f32.partialorder %v472, 0.0
  %v495 = vand.u32 %v472, 2147483648
  %v496 = vsel %vm494, %v495, %v493
  %v497 = vadd.f32 %v496, 1e-08
  %v498 = vrcp.pop %v497
  %v499 = vmul.f32 %v497, %v498
  %v500 = vsub.f32 1.0, %v499
  %v501 = vmul.f32 %v498, %v500
  %v502 = vadd.f32 %v498, %v501
  %vm503 = vweird.f32 %v497
  %vm504 = vweird.f32 %v498
  %vm505 = vmor %vm503, %vm504
  %v506 = vsel %vm505, %v498, %v502
  %v507 = vand.u32 2147483647, %v497
  %vm508 = vcmp.eq.f32.partialorder %v507, 8.507059e+37
  %v509 = vand.u32 %v497, 2147483648
  %v510 = vor.u32 1.1754944e-38, %v509
  %v511 = vsel %vm508, %v510, %v506
  %v512 = vmul.f32 %v484, %v511
  %v513 = vlaneseq
  %v514 = vand.u32 %v513, 127
  %s515 = smul.u32 0, 128
  %s516 = ssub.s32 2, %s515
  %v517 = vstv %s516
  %vm518 = vcmp.lt.s32.totalorder %v514, %v517
  %vm519 = vcmp.gt.f32.partialorder %v484, 1e-06
  %vm520 = vcmp.gt.f32.partialorder %v496, 1e-06
  %vm521 = vmand %vm519, %vm520
  %vm522 = vcmp.lt.f32.partialorder %v512, 10.0
  %vm523 = vmand %vm521, %vm522
  %vm524 = vcmp.gt.f32.partialorder %v512, 0.1
  %vm525 = vmand %vm523, %vm524
  %v526 = vsel %vm518, 1, 0
  %vm527 = vcmp.eq.s32.totalorder %v526, 1
  %vm528 = vmand %vm525, %vm527
  %v529 = vsub.f32 %v512, 1.0
  %v530 = vand.u32 2147483647, %v529
  %v531 = vsel %vm528, %v530, 0.0
  %v532 = vsel %vm527, %v461, 0.0
  %v533 = vmul.f32 %v532, 0.0
  %v534 = vadd.f32 %v531, %v533
  %535 = vadd.xlane.f32.xlu0 %v534
  %v536 = vpop.xlane.xlu0 %535
  %vm537 = vcmask 7168
  %538 = vst.msk [vmem:[%s2] sm:$0xff] %vm537, %v536
  %v539 = vsel %vm528, 1, 0
  %v540 = vcvt.s32.f32 %v539
  %541 = vadd.xlane.f32.xlu0 %v540
  %v542 = vpop.xlane.xlu0 %541
  %543 = vst.msk [vmem:[%s3] sm:$0xff] %vm537, %v542
  // Predicated region
  $region10: #{tpu_custom_call.1} parent=0 // pred_check
    _
  $region11: #{tpu_custom_call.1} parent=0 // pred_check_branch
    %545 = sbr.rel (0) target = $region13
  $region12: #{tpu_custom_call.1} parent=0 // pred_region
    _
  $region13: #{tpu_custom_call.1} parent=0 // pred_fallthru
    _
  // Predicated region
  $region14: #{tpu_custom_call.1} parent=0 // pred_check
    _
  $region15: #{tpu_custom_call.1} parent=0 // pred_check_branch
    %547 = sbr.rel (0) target = $region17
  $region16: #{tpu_custom_call.1} parent=0 // pred_region
    _
  $region17: #{tpu_custom_call.1} parent=0 // pred_fallthru
    _
  // Predicated region
  $region18: #{tpu_custom_call.1} parent=0 // pred_check
    _
  $region19: #{tpu_custom_call.1} parent=0 // pred_check_branch
    %549 = sbr.rel (0) target = $region21
  $region20: #{tpu_custom_call.1} parent=0 // pred_region
    _
  $region21: #{tpu_custom_call.1} parent=0 // pred_fallthru
    _
  // Predicated region
  $region22: #{tpu_custom_call.1} parent=0 // pred_check
    _
  $region23: #{tpu_custom_call.1} parent=0 // pred_check_branch
    %551 = sbr.rel (0) target = $region25
  $region24: #{tpu_custom_call.1} parent=0 // pred_region
    _
  $region25: #{tpu_custom_call.1} parent=0 // pred_fallthru
    _

</llo_original>
